<compile_context>
chip_gen: v5e
topology: v5e:2x2
jax: 0.10.0
libtpu: 0.0.40
codegen_flags: <defaults>
</compile_context>

<pallas_src>
import functools

import jax
import jax.numpy as jnp
from jax.experimental import pallas as pl
from jax.experimental.pallas import tpu as pltpu


def _round_up(x, m):
    return ((x + m - 1) // m) * m


# --------------------------- hardware / capability --------------------------

_HW_CACHE = {}


def _hw_info():
    """(vmem_capacity, is_small_vmem_chip, scoped_vmem_limit) — cached."""
    if "info" not in _HW_CACHE:
        try:
            cap = int(pltpu.get_tpu_info().vmem_capacity_bytes)
        except Exception:  # hardware query only; conservative fallback
            cap = 64 << 20
        small_vmem = cap <= (64 << 20)          # v7x-class: 64 MiB/TC, 2 TCs
        vmem_limit = min(int(cap * 3 // 4), 100 << 20)
        _HW_CACHE["info"] = (cap, small_vmem, vmem_limit)
    return _HW_CACHE["info"]


def _buffered1_supported():
    """Probe whether pipeline_mode=pl.Buffered(1) is accepted for grid-constant
    operands (single-buffering halves the VMEM footprint of resident weights).
    The except is confined to this tiny probe; real kernel errors propagate."""
    if "buf1" not in _HW_CACHE:
        def _probe(a_ref, b_ref, o_ref):
            o_ref[...] = a_ref[...] + b_ref[...]
        try:
            out = pl.pallas_call(
                _probe,
                out_shape=jax.ShapeDtypeStruct((16, 128), jnp.float32),
                grid=(2,),
                in_specs=[pl.BlockSpec((8, 128), lambda i: (i, 0)),
                          pl.BlockSpec((8, 128), lambda i: (0, 0),
                                       pipeline_mode=pl.Buffered(1))],
                out_specs=pl.BlockSpec((8, 128), lambda i: (i, 0)),
            )(jnp.zeros((16, 128), jnp.float32),
              jnp.zeros((8, 128), jnp.float32))
            jax.block_until_ready(out)
            _HW_CACHE["buf1"] = True
        except Exception:  # capability probe, not error handling
            _HW_CACHE["buf1"] = False
    return _HW_CACHE["buf1"]


def _const_spec(shape, single_buffer):
    """BlockSpec for an operand that is identical on every grid step."""
    ndim = len(shape)
    index_map = lambda *_: (0,) * ndim
    if single_buffer:
        return pl.BlockSpec(shape, index_map, pipeline_mode=pl.Buffered(1))
    return pl.BlockSpec(shape, index_map)


# ------------------------------ kernels -------------------------------------

def _linear_kernel(x_ref, w_ref, b_ref, o_ref, *, mxu_dtype):
    x, w = x_ref[...], w_ref[...]
    if mxu_dtype is not None:
        x, w = x.astype(mxu_dtype), w.astype(mxu_dtype)
    y = jnp.dot(x, w, preferred_element_type=jnp.float32)
    o_ref[...] = (y + b_ref[...].astype(jnp.float32)).astype(o_ref.dtype)


def _mlp_kernel(x_ref, w1_ref, b1_ref, w2_ref, b2_ref, o_ref, *, mxu_dtype):
    x, w1, w2 = x_ref[...], w1_ref[...], w2_ref[...]
    if mxu_dtype is not None:
        x, w1, w2 = (x.astype(mxu_dtype), w1.astype(mxu_dtype),
                     w2.astype(mxu_dtype))
    # layer1: Linear + ReLU (f32 MXU accumulate, f32 bias/ReLU on the VPU).
    h = jnp.dot(x, w1, preferred_element_type=jnp.float32)
    h = jnp.maximum(h + b1_ref[...].astype(jnp.float32), 0.0)
    if w2.dtype != jnp.float32:         # fuse ReLU + narrowing cast; skip if f32
        h = h.astype(w2.dtype)
    # layer2: Linear.
    y = jnp.dot(h, w2, preferred_element_type=jnp.float32)
    o_ref[...] = (y + b2_ref[...].astype(jnp.float32)).astype(o_ref.dtype)


def _mlp_ktiled_kernel(x_ref, w1_ref, b1_ref, w2_ref, b2_ref, o_ref, h_acc,
                       *, mxu_dtype):
    # grid = (batch tiles ["parallel"], in_dim tiles ["arbitrary"])
    k = pl.program_id(1)

    @pl.when(k == 0)
    def _():
        h_acc[...] = jnp.zeros_like(h_acc)

    x, w1 = x_ref[...], w1_ref[...]
    if mxu_dtype is not None:
        x, w1 = x.astype(mxu_dtype), w1.astype(mxu_dtype)
    h_acc[...] += jnp.dot(x, w1, preferred_element_type=jnp.float32)

    @pl.when(k == pl.num_programs(1) - 1)
    def _():
        w2 = w2_ref[...]
        if mxu_dtype is not None:
            w2 = w2.astype(mxu_dtype)
        h = jnp.maximum(h_acc[...] + b1_ref[...].astype(jnp.float32), 0.0)
        if w2.dtype != jnp.float32:
            h = h.astype(w2.dtype)
        y = jnp.dot(h, w2, preferred_element_type=jnp.float32)
        o_ref[...] = (y + b2_ref[...].astype(jnp.float32)).astype(o_ref.dtype)


# ------------------------------ wrapper --------------------------------------

def _forward_impl(x, params, *, block_b, block_k, mxu_dtype):
    B, in_dim = x.shape
    x_dtype = x.dtype
    itemsize = jnp.dtype(x_dtype).itemsize
    _, small_vmem, vmem_limit = _hw_info()
    single_buffer = _buffered1_supported()
    weight_bufs = 1 if single_buffer else 2

    # ---- batch tile selection -----------------------------------------------
    row_mult = 16 if x_dtype == jnp.bfloat16 else 8
    if block_b is None:
        if small_vmem:   # v7x-class (64 MiB VMEM / TC)
            default_tile = 512 if x_dtype == jnp.bfloat16 else 256
        else:            # v5e / v6e (128 MiB VMEM): bigger tiles amortize step cost
            default_tile = 1024 if x_dtype == jnp.bfloat16 else 512
        block_b = min(default_tile, _round_up(B, row_mult))
        # v7x has 2 TensorCores: guarantee >= 2 tiles on the "parallel" batch
        # axis so both cores get work (up to ~2x for typical SimCLR batches).
        if small_vmem and block_b >= 2 * row_mult and pl.cdiv(B, block_b) < 2:
            block_b = _round_up(pl.cdiv(B, 2), row_mult)
    block_b = max(row_mult, _round_up(int(block_b), row_mult))

    # No explicit padding: Pallas masks the ragged last batch tile (padded
    # reads, dropped out-of-bounds stores).  Saves the jnp.pad(x) + y[:B] HBM
    # round-trips of the previous version.  Rows are independent, so garbage
    # rows in the ragged tile never leak into stored results.
    grid_b = pl.cdiv(B, block_b)
    rows = grid_b * block_b            # rows actually pushed through the MXU

    compiler_1d = pltpu.CompilerParams(
        dimension_semantics=("parallel",),
        vmem_limit_bytes=vmem_limit)

    if "w2" not in params:  # ------------------- single Linear -----------------
        w1, b1 = params["w1"], params["b1"]
        out_dim = w1.shape[1]
        flops = 2 * rows * in_dim * out_dim
        bytes_accessed = (int(x.size) * itemsize
                          + int(w1.size) * w1.dtype.itemsize
                          + int(b1.size) * b1.dtype.itemsize
                          + B * out_dim * itemsize)
        return pl.pallas_call(
            functools.partial(_linear_kernel, mxu_dtype=mxu_dtype),
            out_shape=jax.ShapeDtypeStruct((B, out_dim), x_dtype),
            grid_spec=pltpu.PrefetchScalarGridSpec(
                num_scalar_prefetch=0,
                grid=(grid_b,),
                in_specs=[
                    pl.BlockSpec((block_b, in_dim), lambda i: (i, 0)),
                    _const_spec((in_dim, out_dim), single_buffer),
                    _const_spec((1, out_dim), single_buffer),
                ],
                out_specs=pl.BlockSpec((block_b, out_dim), lambda i: (i, 0)),
            ),
            compiler_params=compiler_1d,
            cost_estimate=pl.CostEstimate(flops=flops, transcendentals=0,
                                          bytes_accessed=bytes_accessed),
        )(x, w1, b1)

    # ----------------------- Linear -> ReLU -> Linear ---------------------------
    w1, b1, w2, b2 = params["w1"], params["b1"], params["w2"], params["b2"]
    hid = w1.shape[1]
    out_dim = w2.shape[1]
    w_item = w1.dtype.itemsize
    mxu_item = jnp.dtype(mxu_dtype).itemsize if mxu_dtype is not None else 0

    # VMEM-budget-driven K-tiling: keep W1 resident whenever it fits next to the
    # double-buffered x/y tiles, W2, biases, the f32 intermediate and (if used)
    # the bf16 MXU copies.  Streaming W1 costs grid_b x W1_bytes of HBM traffic
    # (doubled on v7x where both TCs stream it concurrently), so the resident
    # path is strongly preferred.
    def _resident_footprint(bb):
        return (2 * bb * in_dim * itemsize                      # x tile (x2 bufs)
                + 2 * bb * out_dim * itemsize                   # y tile (x2 bufs)
                + weight_bufs * (in_dim * hid + hid * out_dim
                                 + hid + out_dim) * w_item      # weights + biases
                + bb * hid * 4                                  # f32 intermediate
                + bb * (in_dim + hid + out_dim) * mxu_item)     # bf16 MXU copies

    budget = int(vmem_limit * 0.8)
    if block_k is None and _resident_footprint(block_b) > budget:
        for cand in (1024, 512, 256, 128):
            if in_dim % cand == 0 and cand < in_dim:
                block_k = cand
                break
    use_ktile = (block_k is not None and block_k < in_dim
                 and in_dim % block_k == 0 and block_k % 128 == 0)
    # TODO(synk): in_dim not divisible by a 128-multiple block_k falls back to
    # the resident path (would need K-masking of x and W1).

    flops = 2 * rows * (in_dim * hid + hid * out_dim)
    w1_bytes = int(w1.size) * w1.dtype.itemsize
    w1_traffic = grid_b * w1_bytes if use_ktile else w1_bytes  # re-fetched per tile
    bytes_accessed = (int(x.size) * itemsize
                      + w1_traffic
                      + sum(int(a.size) * a.dtype.itemsize for a in (b1, w2, b2))
                      + B * out_dim * itemsize)
    cost = pl.CostEstimate(flops=flops, transcendentals=0,
                           bytes_accessed=bytes_accessed)

    if not use_ktile:
        return pl.pallas_call(
            functools.partial(_mlp_kernel, mxu_dtype=mxu_dtype),
            out_shape=jax.ShapeDtypeStruct((B, out_dim), x_dtype),
            grid_spec=pltpu.PrefetchScalarGridSpec(
                num_scalar_prefetch=0,
                grid=(grid_b,),
                in_specs=[
                    pl.BlockSpec((block_b, in_dim), lambda i: (i, 0)),
                    _const_spec((in_dim, hid), single_buffer),
                    _const_spec((1, hid), single_buffer),
                    _const_spec((hid, out_dim), single_buffer),
                    _const_spec((1, out_dim), single_buffer),
                ],
                out_specs=pl.BlockSpec((block_b, out_dim), lambda i: (i, 0)),
            ),
            compiler_params=compiler_1d,
            cost_estimate=cost,
        )(x, w1, b1, w2, b2)

    # K-tiled fallback: only a (block_k, hid) slab of W1 resident per step.
    nk = in_dim // block_k
    return pl.pallas_call(
        functools.partial(_mlp_ktiled_kernel, mxu_dtype=mxu_dtype),
        out_shape=jax.ShapeDtypeStruct((B, out_dim), x_dtype),
        grid_spec=pltpu.PrefetchScalarGridSpec(
            num_scalar_prefetch=0,
            grid=(grid_b, nk),
            in_specs=[
                pl.BlockSpec((block_b, block_k), lambda i, k: (i, k)),
                pl.BlockSpec((block_k, hid), lambda i, k: (k, 0)),
                _const_spec((1, hid), single_buffer),
                _const_spec((hid, out_dim), single_buffer),
                _const_spec((1, out_dim), single_buffer),
            ],
            out_specs=pl.BlockSpec((block_b, out_dim), lambda i, k: (i, 0)),
            scratch_shapes=[pltpu.VMEM((block_b, hid), jnp.float32)],
        ),
        compiler_params=pltpu.CompilerParams(
            dimension_semantics=("parallel", "arbitrary"),
            vmem_limit_bytes=vmem_limit),
        cost_estimate=cost,
    )(x, w1, b1, w2, b2)


def projector_forward(x, params, *, block_b=None, block_k=None, mxu_bf16=False):
    """Forward pass of the SimCLR Projector (Pallas TPU).

    params: dict with either
      {"w1": (in, out),  "b1": (1, out)}                                   # hidden_dim=None
      {"w1": (in, hid), "b1": (1, hid), "w2": (hid, out), "b2": (1, out)}  # with hidden_dim

    mxu_bf16: cast MXU operands of an f32 model to bf16 (f32 accumulate, f32
    bias/ReLU).  3-4x faster on v6e/v7x's bf16 MXU; opt-in because it relaxes
    an f32 model's matmul precision to bf16.
    """
    mxu_dtype = jnp.bfloat16 if (mxu_bf16 and x.dtype == jnp.float32) else None
    return _forward_impl(x, params, block_b=block_b, block_k=block_k,
                         mxu_dtype=mxu_dtype)


def init_projector_params(key, in_dim, hidden_dim=None, out_dim=128,
                          dtype=jnp.float32):
    """Deterministic init mirroring nn.Linear shapes (weights stored transposed)."""
    if hidden_dim is None:
        k1, k2 = jax.random.split(key, 2)
        bound = 1.0 / jnp.sqrt(in_dim)
        return {
            "w1": jax.random.uniform(k1, (in_dim, out_dim), dtype, -bound, bound),
            "b1": jax.random.uniform(k2, (1, out_dim), dtype, -bound, bound),
        }
    k1, k2, k3, k4 = jax.random.split(key, 4)
    bd1 = 1.0 / jnp.sqrt(in_dim)
    bd2 = 1.0 / jnp.sqrt(hidden_dim)
    return {
        "w1": jax.random.uniform(k1, (in_dim, hidden_dim), dtype, -bd1, bd1),
        "b1": jax.random.uniform(k2, (1, hidden_dim), dtype, -bd1, bd1),
        "w2": jax.random.uniform(k3, (hidden_dim, out_dim), dtype, -bd2, bd2),
        "b2": jax.random.uniform(k4, (1, out_dim), dtype, -bd2, bd2),
    }


# ------------------------------ reference ------------------------------------

def projector_ref(x, params):
    f32 = jnp.float32
    y = x.astype(f32) @ params["w1"].astype(f32) + params["b1"].astype(f32)
    if "w2" in params:
        y = jnp.maximum(y, 0.0)
        y = y @ params["w2"].astype(f32) + params["b2"].astype(f32)
    return y


if __name__ == "__main__":
    key = jax.random.PRNGKey(0)
    kx1, kx2, kp1, kp2, kp3 = jax.random.split(key, 5)

    # Case 1: MLP projector, f32, ragged batch (B=13, block_b=8 -> grid=(2,),
    # partial last block handled by Pallas masking; no jnp.pad / slice).
    B, in_dim, hid, out_dim = 13, 32, 64, 128
    x = jax.random.normal(kx1, (B, in_dim), jnp.float32)
    params = init_projector_params(kp1, in_dim, hid, out_dim)
    y = jax.block_until_ready(projector_forward(x, params, block_b=8))
    assert y.shape == (B, out_dim)
    assert jnp.allclose(y, projector_ref(x, params), atol=1e-4, rtol=1e-4)

    # Case 1b: auto tile selection (per-generation defaults + >=2-tile rule).
    y_auto = jax.block_until_ready(projector_forward(x, params))
    assert jnp.allclose(y_auto, projector_ref(x, params), atol=1e-4, rtol=1e-4)

    # Case 2: explicit K-tiling of in_dim (accumulator + pl.when path).
    B2, in_dim2 = 16, 256
    x2 = jax.random.normal(kx2, (B2, in_dim2), jnp.float32)
    params2 = init_projector_params(kp2, in_dim2, hid, out_dim)
    y2 = jax.block_until_ready(
        projector_forward(x2, params2, block_b=8, block_k=128))
    assert y2.shape == (B2, out_dim)
    assert jnp.allclose(y2, projector_ref(x2, params2), atol=1e-3, rtol=1e-3)

    # Case 3: hidden_dim=None (single Linear), ragged batch.
    params3 = init_projector_params(kp3, in_dim, None, out_dim)
    y3 = jax.block_until_ready(projector_forward(x, params3, block_b=8))
    assert y3.shape == (B, out_dim)
    assert jnp.allclose(y3, projector_ref(x, params3), atol=1e-4, rtol=1e-4)

    # Case 4: bf16 weights + activations (f32 MXU accumulate, f32 bias/ReLU).
    xb = x.astype(jnp.bfloat16)
    params_b = jax.tree_util.tree_map(lambda a: a.astype(jnp.bfloat16), params)
    yb = jax.block_until_ready(projector_forward(xb, params_b, block_b=16))
    assert yb.shape == (B, out_dim)
    assert jnp.allclose(yb.astype(jnp.float32), projector_ref(x, params),
                        atol=0.1, rtol=0.1)

    # Case 5: f32 model with bf16 MXU operands (opt-in v6e/v7x fast path).
    y5 = jax.block_until_ready(projector_forward(x, params, mxu_bf16=True))
    assert jnp.allclose(y5, projector_ref(x, params), atol=0.1, rtol=0.1)

    print("KERNEL_OK")
</pallas_src>

<mosaic_0001>
module attributes {stable_mosaic.version = 11 : i64} {
  func.func @_probe(%arg0: i32, %arg1: memref<8x128xf32, #tpu.memory_space<vmem>>, %arg2: memref<8x128xf32, #tpu.memory_space<vmem>>, %arg3: memref<8x128xf32, #tpu.memory_space<vmem>>) attributes {dimension_semantics = [#tpu.dimension_semantics<arbitrary>], iteration_bounds = array<i64: 2>, scalar_prefetch = 0 : i64, scratch_operands = 0 : i64, tpu.core_type = #tpu.core_type<tc>, window_params = [{transform_indices = @transform_0, window_bounds = array<i64: 8, 128>}, {pipeline_mode = #tpu.pipeline_mode<synchronous>, transform_indices = @transform_1, window_bounds = array<i64: 8, 128>}, {transform_indices = @transform_2, window_bounds = array<i64: 8, 128>}]} {
    %c0 = arith.constant 0 : index
    %c0_0 = arith.constant 0 : index
    %0 = vector.load %arg1[%c0, %c0_0] : memref<8x128xf32, #tpu.memory_space<vmem>>, vector<8x128xf32>
    %c0_1 = arith.constant 0 : index
    %c0_2 = arith.constant 0 : index
    %1 = vector.load %arg2[%c0_1, %c0_2] : memref<8x128xf32, #tpu.memory_space<vmem>>, vector<8x128xf32>
    %2 = arith.addf %0, %1 : vector<8x128xf32>
    %c0_3 = arith.constant 0 : index
    %c0_4 = arith.constant 0 : index
    %3 = vector.load %arg3[%c0_3, %c0_4] : memref<8x128xf32, #tpu.memory_space<vmem>>, vector<8x128xf32>
    tpu.vector_store %arg3[%c0_3, %c0_4], %2 {strides = array<i32>} : memref<8x128xf32, #tpu.memory_space<vmem>>, vector<8x128xf32>,
    return
  }
  func.func @transform_0(%arg0: i32) -> (i32, i32) {
    %c0_i32 = arith.constant 0 : i32
    %c0_i32_0 = arith.constant 0 : i32
    return %arg0, %c0_i32 : i32, i32
  }
  func.func @transform_1(%arg0: i32) -> (i32, i32) {
    %c0_i32 = arith.constant 0 : i32
    %c0_i32_0 = arith.constant 0 : i32
    %c0_i32_1 = arith.constant 0 : i32
    return %c0_i32, %c0_i32_0 : i32, i32
  }
  func.func @transform_2(%arg0: i32) -> (i32, i32) {
    %c0_i32 = arith.constant 0 : i32
    %c0_i32_0 = arith.constant 0 : i32
    return %arg0, %c0_i32 : i32, i32
  }
}

module attributes {stable_mosaic.version = 11 : i64} {
  func.func @_mlp_kernel(%arg0: i32, %arg1: memref<8x32xf32, #tpu.memory_space<vmem>>, %arg2: memref<32x64xf32, #tpu.memory_space<vmem>>, %arg3: memref<1x64xf32, #tpu.memory_space<vmem>>, %arg4: memref<64x128xf32, #tpu.memory_space<vmem>>, %arg5: memref<1x128xf32, #tpu.memory_space<vmem>>, %arg6: memref<8x128xf32, #tpu.memory_space<vmem>>) attributes {dimension_semantics = [#tpu.dimension_semantics<parallel>], iteration_bounds = array<i64: 2>, scalar_prefetch = 0 : i64, scratch_operands = 0 : i64, tpu.core_type = #tpu.core_type<tc>, window_params = [{transform_indices = @transform_0, window_bounds = array<i64: 8, 32>}, {pipeline_mode = #tpu.pipeline_mode<synchronous>, transform_indices = @transform_1, window_bounds = array<i64: 32, 64>}, {pipeline_mode = #tpu.pipeline_mode<synchronous>, transform_indices = @transform_2, window_bounds = array<i64: 1, 64>}, {pipeline_mode = #tpu.pipeline_mode<synchronous>, transform_indices = @transform_3, window_bounds = array<i64: 64, 128>}, {pipeline_mode = #tpu.pipeline_mode<synchronous>, transform_indices = @transform_4, window_bounds = array<i64: 1, 128>}, {transform_indices = @transform_5, window_bounds = array<i64: 8, 128>}]} {
    %c0 = arith.constant 0 : index
    %c0_0 = arith.constant 0 : index
    %0 = vector.load %arg1[%c0, %c0_0] : memref<8x32xf32, #tpu.memory_space<vmem>>, vector<8x32xf32>
    %c0_1 = arith.constant 0 : index
    %c0_2 = arith.constant 0 : index
    %1 = vector.load %arg2[%c0_1, %c0_2] : memref<32x64xf32, #tpu.memory_space<vmem>>, vector<32x64xf32>
    %c0_3 = arith.constant 0 : index
    %c0_4 = arith.constant 0 : index
    %2 = vector.load %arg4[%c0_3, %c0_4] : memref<64x128xf32, #tpu.memory_space<vmem>>, vector<64x128xf32>
    %cst = arith.constant dense<0.000000e+00> : vector<8x64xf32>
    %3 = tpu.matmul %0, %1, %cst {dimension_numbers = #tpu.dot_dimension_numbers<[1], [0], [0], [1], [0, 0, 1, 1], [], []>} : vector<8x32xf32>, vector<32x64xf32>, vector<8x64xf32> -> vector<8x64xf32>
    %c0_5 = arith.constant 0 : index
    %c0_6 = arith.constant 0 : index
    %4 = vector.load %arg3[%c0_5, %c0_6] : memref<1x64xf32, #tpu.memory_space<vmem>>, vector<1x64xf32>
    %5 = vector.broadcast %4 : vector<1x64xf32> to vector<8x64xf32>
    %6 = arith.addf %3, %5 : vector<8x64xf32>
    %cst_7 = arith.constant 0.000000e+00 : f32
    %7 = vector.broadcast %cst_7 : f32 to vector<8x64xf32>
    %8 = arith.maximumf %6, %7 : vector<8x64xf32>
    %cst_8 = arith.constant dense<0.000000e+00> : vector<8x128xf32>
    %9 = tpu.matmul %8, %2, %cst_8 {dimension_numbers = #tpu.dot_dimension_numbers<[1], [0], [0], [1], [0, 0, 1, 1], [], []>} : vector<8x64xf32>, vector<64x128xf32>, vector<8x128xf32> -> vector<8x128xf32>
    %c0_9 = arith.constant 0 : index
    %c0_10 = arith.constant 0 : index
    %10 = vector.load %arg5[%c0_9, %c0_10] : memref<1x128xf32, #tpu.memory_space<vmem>>, vector<1x128xf32>
    %11 = vector.broadcast %10 : vector<1x128xf32> to vector<8x128xf32>
    %12 = arith.addf %9, %11 : vector<8x128xf32>
    %c0_11 = arith.constant 0 : index
    %c0_12 = arith.constant 0 : index
    %13 = vector.load %arg6[%c0_11, %c0_12] : memref<8x128xf32, #tpu.memory_space<vmem>>, vector<8x128xf32>
    tpu.vector_store %arg6[%c0_11, %c0_12], %12 {strides = array<i32>} : memref<8x128xf32, #tpu.memory_space<vmem>>, vector<8x128xf32>,
    return
  }
  func.func @transform_0(%arg0: i32) -> (i32, i32) {
    %c0_i32 = arith.constant 0 : i32
    %c0_i32_0 = arith.constant 0 : i32
    return %arg0, %c0_i32 : i32, i32
  }
  func.func @transform_1(%arg0: i32) -> (i32, i32) {
    %c0_i32 = arith.constant 0 : i32
    %c0_i32_0 = arith.constant 0 : i32
    %c0_i32_1 = arith.constant 0 : i32
    return %c0_i32, %c0_i32_0 : i32, i32
  }
  func.func @transform_2(%arg0: i32) -> (i32, i32) {
    %c0_i32 = arith.constant 0 : i32
    %c0_i32_0 = arith.constant 0 : i32
    %c0_i32_1 = arith.constant 0 : i32
    return %c0_i32, %c0_i32_0 : i32, i32
  }
  func.func @transform_3(%arg0: i32) -> (i32, i32) {
    %c0_i32 = arith.constant 0 : i32
    %c0_i32_0 = arith.constant 0 : i32
    %c0_i32_1 = arith.constant 0 : i32
    return %c0_i32, %c0_i32_0 : i32, i32
  }
  func.func @transform_4(%arg0: i32) -> (i32, i32) {
    %c0_i32 = arith.constant 0 : i32
    %c0_i32_0 = arith.constant 0 : i32
    %c0_i32_1 = arith.constant 0 : i32
    return %c0_i32, %c0_i32_0 : i32, i32
  }
  func.func @transform_5(%arg0: i32) -> (i32, i32) {
    %c0_i32 = arith.constant 0 : i32
    %c0_i32_0 = arith.constant 0 : i32
    return %arg0, %c0_i32 : i32, i32
  }
}

</mosaic_0001>

<llo_original>
// kernel: tpu_custom_call.1
$region0: #{tpu_custom_call.1}
  #allocation0 [shape = 'u32[]', space=smem, size = 0x4, offset = 0x4, fixed_abs, tag = 'smem constant byte address 0x4 - core index']
  #allocation1 [shape = 'u32[72,128]{1,0:T(1,128)}', space=vmem, size = 0x9000, scoped, tag = 'internal scratch']
  %s0 = inlined_call_operand.hbm [shape: f32[16,128], index: 0, kind: input, shape index: {}]
  %s1 = inlined_call_operand.hbm [shape: f32[8,128], index: 1, kind: input, shape index: {}]
  %s2 = inlined_call_operand.hbm [shape: f32[16,128], index: 2, kind: output, shape index: {}]
  %s3 = sld [smem:[#allocation0]]
  $region49: #{tpu_custom_call.1} parent=0
    _
  %s5 = ssub.s32 1, %s3
  %s6 = scalar_select 0, %s5, %s3
  $region1: #{tpu_custom_call.1} parent=0
    #allocation2 [shape = 'u8[8192]{0}', space=vmem, size = 0x2000, scoped, tag = 'input window, operand 0']
    #allocation3 [shape = 's32[2]{0}', space=sflag, size = 0x8, scoped, tag = 'scoped memory for tpu_custom_call.1']
    #allocation4 [shape = 's32[2]{0}', space=sflag, size = 0x8, scoped, tag = 'scoped memory for tpu_custom_call.1']
    #allocation5 [shape = 'u8[4096]{0}', space=vmem, size = 0x1000, scoped, tag = 'input window, operand 1, single buffered']
    #allocation6 [shape = 's32[1]{0}', space=sflag, size = 0x4, scoped, tag = 'scoped memory for tpu_custom_call.1']
    #allocation7 [shape = 'u8[8192]{0}', space=vmem, size = 0x2000, scoped, tag = 'output window, operand 0']
    %7 = vsyncpa [#allocation3], 0
    %s8 = scalar_lea.sflag [#allocation3], 1
    %9 = vsyncpa %s8, 0
    %10 = vsyncpa [#allocation6], 0
    %11 = vsyncpa [#allocation4], 0
    %s12 = scalar_lea.sflag [#allocation4], 1
    %13 = vsyncpa %s12, 0
    loop: start=0, step=1, limit=4
    $region2: #{tpu_custom_call.1} parent=1 // loop_pre_header
      _
    $region3: #{tpu_custom_call.1} parent=1 // loop_header
      %s15 = sphi 0, %s19
      %p16 = scmp.ge.s32.totalorder %s15, 4
      %s25 = sphi 0, %s27
      %s28 = sphi 0, %s25
      %s29 = sphi 0, %s28
      %s45 = sphi 0, %s29
      %s49 = sphi 0, %s49
      %s51 = sphi 0, %s49
      %s52 = sphi 0, %s51
      %s66 = sphi 0, %s52
      %s72 = sphi 0, %s74
      %s75 = sphi 0, %s72
      %s76 = sphi 0, %s75
      %s92 = sphi 0, %s76
    $region4: #{tpu_custom_call.1} parent=1 // loop_header_branch
      %18 = sbr.rel (%p16) target = $region8
    $region5: #{tpu_custom_call.1} parent=1 // loop_body
      %s20 = ssub.s32 %s15, 1
      %s21 = ssub.s32 %s15, 2
      %s22 = sadd.s32 %s15, 1
      %s23 = ssub.s32 %s15, %s22
      %p24 = scmp.eq.s32.totalorder %s23, 0
      %s26 = sadd.s32 %s25, 1
      %s27 = scalar_select %p24, %s25, %s26
      %p30 = pneg %p24
      %p31 = scmp.eq.s32.totalorder %s15, 1
      %p32 = por %p30, %p31
      %p33 = scmp.ne.s32.totalorder %s25, %s28
      %p34 = scmp.eq.s32.totalorder %s15, 0
      %p35 = por %p33, %p34
      %p36 = scmp.ne.s32.totalorder %s25, %s28
      %p37 = scmp.eq.s32.totalorder %s20, 1
      %p38 = por %p36, %p37
      %p39 = scmp.ne.s32.totalorder %s28, %s29
      %p40 = scmp.eq.s32.totalorder %s20, 0
      %p41 = por %p39, %p40
      %p42 = scmp.ne.s32.totalorder %s28, %s29
      %p43 = scmp.eq.s32.totalorder %s21, 1
      %p44 = por %p42, %p43
      %p46 = scmp.ne.s32.totalorder %s29, %s45
      %p47 = scmp.eq.s32.totalorder %s21, 0
      %p48 = por %p46, %p47
      %s50 = sadd.s32 %s49, 1
      %p53 = scmp.eq.s32.totalorder %s15, 1
      %p54 = scmp.ne.s32.totalorder %s49, %s51
      %p55 = scmp.eq.s32.totalorder %s15, 0
      %p56 = por %p54, %p55
      %p57 = scmp.ne.s32.totalorder %s49, %s51
      %p58 = scmp.eq.s32.totalorder %s20, 1
      %p59 = por %p57, %p58
      %p60 = scmp.ne.s32.totalorder %s51, %s52
      %p61 = scmp.eq.s32.totalorder %s20, 0
      %p62 = por %p60, %p61
      %p63 = scmp.ne.s32.totalorder %s51, %s52
      %p64 = scmp.eq.s32.totalorder %s21, 1
      %p65 = por %p63, %p64
      %p67 = scmp.ne.s32.totalorder %s52, %s66
      %p68 = scmp.eq.s32.totalorder %s21, 0
      %p69 = por %p67, %p68
      %s70 = ssub.s32 %s15, %s22
      %p71 = scmp.eq.s32.totalorder %s70, 0
      %s73 = sadd.s32 %s72, 1
      %s74 = scalar_select %p71, %s72, %s73
      %p77 = pneg %p71
      %p78 = scmp.eq.s32.totalorder %s15, 1
      %p79 = por %p77, %p78
      %p80 = scmp.ne.s32.totalorder %s72, %s75
      %p81 = scmp.eq.s32.totalorder %s15, 0
      %p82 = por %p80, %p81
      %p83 = scmp.ne.s32.totalorder %s72, %s75
      %p84 = scmp.eq.s32.totalorder %s20, 1
      %p85 = por %p83, %p84
      %p86 = scmp.ne.s32.totalorder %s75, %s76
      %p87 = scmp.eq.s32.totalorder %s20, 0
      %p88 = por %p86, %p87
      %p89 = scmp.ne.s32.totalorder %s75, %s76
      %p90 = scmp.eq.s32.totalorder %s21, 1
      %p91 = por %p89, %p90
      %p93 = scmp.ne.s32.totalorder %s76, %s92
      %p94 = scmp.eq.s32.totalorder %s21, 0
      %p95 = por %p93, %p94
      %p96 = scmp.le.s32.totalorder 1, %s15
      %p97 = scmp.lt.s32.totalorder %s15, 3
      %p98 = pnand %p96, %p97
      %p99 = pneg %p98
      // Predicated region
      $region9: #{tpu_custom_call.1} parent=5 // pred_check
        _
      $region10: #{tpu_custom_call.1} parent=5 // pred_check_branch
        %101 = sbr.rel (%p98) target = $region12
      $region11: #{tpu_custom_call.1} parent=5 // pred_region
        %s102 = ssub.s32 %s15, 1
        // Predicated region
        $region13: #{tpu_custom_call.1} parent=11 // pred_check
          %p103 = pneg %p62
        $region14: #{tpu_custom_call.1} parent=11 // pred_check_branch
          %105 = sbr.rel (%p103) target = $region16
        $region15: #{tpu_custom_call.1} parent=11 // pred_region
          %107 = vsyncadd [#allocation6], 0
          %s109 = sshll.u32 %s1, 4
          %s110 = int_to_ptr.hbm [resolvable:$true] %s109
          %s111 = sshll.u32 [#allocation5], 4
          %s112 = int_to_ptr.vmem [resolvable:$true] %s111
          %114 = dma.hbm_to_vmem [thread:$0]  %s110, 128, %s112, [#allocation6]
        $region16: #{tpu_custom_call.1} parent=11 // pred_fallthru
          _
      $region12: #{tpu_custom_call.1} parent=5 // pred_fallthru
        _
      %p115 = scmp.lt.s32.totalorder %s15, 2
      // Predicated region
      $region17: #{tpu_custom_call.1} parent=5 // pred_check
        %p116 = pneg %p115
      $region18: #{tpu_custom_call.1} parent=5 // pred_check_branch
        %118 = sbr.rel (%p116) target = $region20
      $region19: #{tpu_custom_call.1} parent=5 // pred_region
        // Predicated region
        $region21: #{tpu_custom_call.1} parent=19 // pred_check
          %p119 = pneg %p35
        $region22: #{tpu_custom_call.1} parent=19 // pred_check_branch
          %121 = sbr.rel (%p119) target = $region24
        $region23: #{tpu_custom_call.1} parent=19 // pred_region
          %s122 = sand.u32 %s25, 1
          %s123 = scalar_lea.sflag [#allocation3], %s122
          %s124 = sand.u32 %s25, 1
          %s125 = smul.addr %s124, 8
          %s126 = scalar_lea.vmem [#allocation2], %s125
          %128 = vsyncadd %s123, 0
          %s129 = smul.addr %s15, 8
          %s130 = scalar_lea.hbm %s0, %s129
          %s132 = sshll.u32 %s130, 4
          %s133 = int_to_ptr.hbm [resolvable:$true] %s132
          %s134 = sshll.u32 %s126, 4
          %s135 = int_to_ptr.vmem [resolvable:$true] %s134
          %137 = dma.hbm_to_vmem [thread:$0]  %s133, 128, %s135, %s123
        $region24: #{tpu_custom_call.1} parent=19 // pred_fallthru
          _
      $region20: #{tpu_custom_call.1} parent=5 // pred_fallthru
        _
      %p138 = scmp.le.s32.totalorder 1, %s15
      %p139 = scmp.lt.s32.totalorder %s15, 3
      %p140 = pnand %p138, %p139
      %p141 = pneg %p140
      // Predicated region
      $region25: #{tpu_custom_call.1} parent=5 // pred_check
        _
      $region26: #{tpu_custom_call.1} parent=5 // pred_check_branch
        %143 = sbr.rel (%p140) target = $region28
      $region27: #{tpu_custom_call.1} parent=5 // pred_region
        %s144 = ssub.s32 %s15, 1
        %s145 = sand.u32 %s28, 1
        %s146 = scalar_lea.sflag [#allocation3], %s145
        %s147 = sand.u32 %s28, 1
        %s148 = smul.addr %s147, 8
        %s149 = scalar_lea.vmem [#allocation2], %s148
        // Predicated region
        $region29: #{tpu_custom_call.1} parent=27 // pred_check
          %p150 = pneg %p41
        $region30: #{tpu_custom_call.1} parent=27 // pred_check_branch
          %152 = sbr.rel (%p150) target = $region32
        $region31: #{tpu_custom_call.1} parent=27 // pred_region
          %154 = dma.done %s146, 128
        $region32: #{tpu_custom_call.1} parent=27 // pred_fallthru
          _
        // Predicated region
        $region33: #{tpu_custom_call.1} parent=27 // pred_check
          %p155 = pneg %p62
        $region34: #{tpu_custom_call.1} parent=27 // pred_check_branch
          %157 = sbr.rel (%p155) target = $region36
        $region35: #{tpu_custom_call.1} parent=27 // pred_region
          %159 = dma.done [#allocation6], 128
        $region36: #{tpu_custom_call.1} parent=27 // pred_fallthru
          _
        %s160 = sand.u32 %s28, 1
        %s161 = scalar_lea.sflag [#allocation3], %s160
        %s162 = sand.u32 %s28, 1
        %s163 = smul.addr %s162, 8
        %s164 = scalar_lea.vmem [#allocation2], %s163
        %p165 = pneg %p41
        %p166 = pneg %p38
        %p167 = pneg %p62
        %p168 = pneg %p59
        %p169 = pneg %p88
        %p170 = pneg %p85
        %s171 = sand.u32 %s75, 1
        %s172 = scalar_lea.sflag [#allocation4], %s171
        %s173 = sand.u32 %s75, 1
        %s174 = smul.addr %s173, 8
        %s175 = scalar_lea.vmem [#allocation7], %s174
        %v176 = vld [vmem:[%s149] sm:$0xff]
        %v177 = vld [vmem:[#allocation5] sm:$0xff]
        %v178 = vadd.f32 %v176, %v177
        %179 = vst [vmem:[%s175] sm:$0xff] %v178
        %s180 = sand.u32 %s75, 1
        %s181 = scalar_lea.sflag [#allocation4], %s180
        %s182 = sand.u32 %s75, 1
        %s183 = smul.addr %s182, 8
        %s184 = scalar_lea.vmem [#allocation7], %s183
        // Predicated region
        $region37: #{tpu_custom_call.1} parent=27 // pred_check
          %p185 = pneg %p85
        $region38: #{tpu_custom_call.1} parent=27 // pred_check_branch
          %187 = sbr.rel (%p185) target = $region40
        $region39: #{tpu_custom_call.1} parent=27 // pred_region
          %189 = vsyncadd %s181, 0
          %s190 = smul.addr %s20, 8
          %s191 = scalar_lea.hbm %s2, %s190
          %s193 = sshll.u32 %s184, 4
          %s194 = int_to_ptr.vmem [resolvable:$true] %s193
          %s195 = sshll.u32 %s191, 4
          %s196 = int_to_ptr.hbm [resolvable:$true] %s195
          %198 = dma.vmem_to_hbm [thread:$0]  %s194, 128, %s196, %s181
        $region40: #{tpu_custom_call.1} parent=27 // pred_fallthru
          _
      $region28: #{tpu_custom_call.1} parent=5 // pred_fallthru
        _
      %p199 = scmp.le.s32.totalorder 2, %s15
      // Predicated region
      $region41: #{tpu_custom_call.1} parent=5 // pred_check
        %p200 = pneg %p199
      $region42: #{tpu_custom_call.1} parent=5 // pred_check_branch
        %202 = sbr.rel (%p200) target = $region44
      $region43: #{tpu_custom_call.1} parent=5 // pred_region
        %s203 = ssub.s32 %s15, 2
        // Predicated region
        $region45: #{tpu_custom_call.1} parent=43 // pred_check
          %p204 = pneg %p91
        $region46: #{tpu_custom_call.1} parent=43 // pred_check_branch
          %206 = sbr.rel (%p204) target = $region48
        $region47: #{tpu_custom_call.1} parent=43 // pred_region
          %s207 = sand.u32 %s76, 1
          %s208 = scalar_lea.sflag [#allocation4], %s207
          %s209 = sand.u32 %s76, 1
          %s210 = smul.addr %s209, 8
          %s211 = scalar_lea.vmem [#allocation7], %s210
          %213 = dma.done %s208, 128
        $region48: #{tpu_custom_call.1} parent=43 // pred_fallthru
          _
      $region44: #{tpu_custom_call.1} parent=5 // pred_fallthru
        _
    $region6: #{tpu_custom_call.1} parent=1 // loop_footer
      %s19 = sadd.s32 1, %s15
    $region7: #{tpu_custom_call.1} parent=1 // loop_footer_branch
      %14 = sbr.rel target = $region3
    $region8: #{tpu_custom_call.1} parent=1 // loop_exit
      _
    %214 = vsyncpa [#allocation3], 1
    %s215 = scalar_lea.sflag [#allocation3], 1
    %216 = vsyncpa %s215, 1
    %217 = vsyncpa [#allocation6], 1
    %218 = vsyncpa [#allocation4], 1
    %s219 = scalar_lea.sflag [#allocation4], 1
    %220 = vsyncpa %s219, 1

// kernel: tpu_custom_call.1
$region0: #{tpu_custom_call.1}
  #allocation0 [shape = 'u32[]', space=smem, size = 0x4, offset = 0x4, fixed_abs, tag = 'smem constant byte address 0x4 - core index']
  #allocation1 [shape = 'u32[72,128]{1,0:T(1,128)}', space=vmem, size = 0x9000, scoped, tag = 'internal scratch']
  %s0 = inlined_call_operand.hbm [shape: f32[13,32], index: 0, kind: input, shape index: {}]
  %s1 = inlined_call_operand.hbm [shape: f32[32,64], index: 1, kind: input, shape index: {}]
  %s2 = inlined_call_operand.vmem [shape: f32[1,64], index: 2, kind: input, shape index: {}]
  %s3 = inlined_call_operand.hbm [shape: f32[64,128], index: 3, kind: input, shape index: {}]
  %s4 = inlined_call_operand.vmem [shape: f32[1,128], index: 4, kind: input, shape index: {}]
  %s5 = inlined_call_operand.hbm [shape: f32[13,128], index: 5, kind: output, shape index: {}]
  %s6 = sld [smem:[#allocation0]]
  $region65: #{tpu_custom_call.1} parent=0
    _
  %s8 = ssub.s32 1, %s6
  %s9 = scalar_select 0, %s8, %s6
  $region1: #{tpu_custom_call.1} parent=0
    #allocation2 [shape = 'u8[8192]{0}', space=vmem, size = 0x2000, scoped, tag = 'input window, operand 0']
    #allocation3 [shape = 's32[2]{0}', space=sflag, size = 0x8, scoped, tag = 'scoped memory for tpu_custom_call.1']
    #allocation4 [shape = 's32[2]{0}', space=sflag, size = 0x8, scoped, tag = 'scoped memory for tpu_custom_call.1']
    #allocation5 [shape = 'u8[16384]{0}', space=vmem, size = 0x4000, scoped, tag = 'input window, operand 1, single buffered']
    #allocation6 [shape = 's32[1]{0}', space=sflag, size = 0x4, scoped, tag = 'scoped memory for tpu_custom_call.1']
    #allocation7 [shape = 'u8[32768]{0}', space=vmem, size = 0x8000, scoped, tag = 'input window, operand 3, single buffered']
    #allocation8 [shape = 'u8[8192]{0}', space=vmem, size = 0x2000, scoped, tag = 'output window, operand 0']
    %10 = vsyncpa [#allocation3], 0
    %s11 = scalar_lea.sflag [#allocation3], 1
    %12 = vsyncpa %s11, 0
    %13 = vsyncpa [#allocation6], 0
    %14 = vsyncpa [#allocation4], 0
    %s15 = scalar_lea.sflag [#allocation4], 1
    %16 = vsyncpa %s15, 0
    loop: start=0, step=1, limit=4
    $region2: #{tpu_custom_call.1} parent=1 // loop_pre_header
      _
    $region3: #{tpu_custom_call.1} parent=1 // loop_header
      %s18 = sphi 0, %s22
      %p19 = scmp.ge.s32.totalorder %s18, 4
      %s28 = sphi 0, %s30
      %s31 = sphi 0, %s28
      %s32 = sphi 0, %s31
      %s48 = sphi 0, %s32
      %s52 = sphi 0, %s52
      %s54 = sphi 0, %s52
      %s55 = sphi 0, %s54
      %s69 = sphi 0, %s55
      %s73 = sphi 0, %s73
      %s75 = sphi 0, %s73
      %s76 = sphi 0, %s75
      %s90 = sphi 0, %s76
      %s94 = sphi 0, %s94
      %s96 = sphi 0, %s94
      %s97 = sphi 0, %s96
      %s111 = sphi 0, %s97
      %s115 = sphi 0, %s115
      %s117 = sphi 0, %s115
      %s118 = sphi 0, %s117
      %s132 = sphi 0, %s118
      %s138 = sphi 0, %s140
      %s141 = sphi 0, %s138
      %s142 = sphi 0, %s141
      %s158 = sphi 0, %s142
    $region4: #{tpu_custom_call.1} parent=1 // loop_header_branch
      %21 = sbr.rel (%p19) target = $region8
    $region5: #{tpu_custom_call.1} parent=1 // loop_body
      %s23 = ssub.s32 %s18, 1
      %s24 = ssub.s32 %s18, 2
      %s25 = sadd.s32 %s18, 1
      %s26 = ssub.s32 %s18, %s25
      %p27 = scmp.eq.s32.totalorder %s26, 0
      %s29 = sadd.s32 %s28, 1
      %s30 = scalar_select %p27, %s28, %s29
      %p33 = pneg %p27
      %p34 = scmp.eq.s32.totalorder %s18, 1
      %p35 = por %p33, %p34
      %p36 = scmp.ne.s32.totalorder %s28, %s31
      %p37 = scmp.eq.s32.totalorder %s18, 0
      %p38 = por %p36, %p37
      %p39 = scmp.ne.s32.totalorder %s28, %s31
      %p40 = scmp.eq.s32.totalorder %s23, 1
      %p41 = por %p39, %p40
      %p42 = scmp.ne.s32.totalorder %s31, %s32
      %p43 = scmp.eq.s32.totalorder %s23, 0
      %p44 = por %p42, %p43
      %p45 = scmp.ne.s32.totalorder %s31, %s32
      %p46 = scmp.eq.s32.totalorder %s24, 1
      %p47 = por %p45, %p46
      %p49 = scmp.ne.s32.totalorder %s32, %s48
      %p50 = scmp.eq.s32.totalorder %s24, 0
      %p51 = por %p49, %p50
      %s53 = sadd.s32 %s52, 1
      %p56 = scmp.eq.s32.totalorder %s18, 1
      %p57 = scmp.ne.s32.totalorder %s52, %s54
      %p58 = scmp.eq.s32.totalorder %s18, 0
      %p59 = por %p57, %p58
      %p60 = scmp.ne.s32.totalorder %s52, %s54
      %p61 = scmp.eq.s32.totalorder %s23, 1
      %p62 = por %p60, %p61
      %p63 = scmp.ne.s32.totalorder %s54, %s55
      %p64 = scmp.eq.s32.totalorder %s23, 0
      %p65 = por %p63, %p64
      %p66 = scmp.ne.s32.totalorder %s54, %s55
      %p67 = scmp.eq.s32.totalorder %s24, 1
      %p68 = por %p66, %p67
      %p70 = scmp.ne.s32.totalorder %s55, %s69
      %p71 = scmp.eq.s32.totalorder %s24, 0
      %p72 = por %p70, %p71
      %s74 = sadd.s32 %s73, 1
      %p77 = scmp.eq.s32.totalorder %s18, 1
      %p78 = scmp.ne.s32.totalorder %s73, %s75
      %p79 = scmp.eq.s32.totalorder %s18, 0
      %p80 = por %p78, %p79
      %p81 = scmp.ne.s32.totalorder %s73, %s75
      %p82 = scmp.eq.s32.totalorder %s23, 1
      %p83 = por %p81, %p82
      %p84 = scmp.ne.s32.totalorder %s75, %s76
      %p85 = scmp.eq.s32.totalorder %s23, 0
      %p86 = por %p84, %p85
      %p87 = scmp.ne.s32.totalorder %s75, %s76
      %p88 = scmp.eq.s32.totalorder %s24, 1
      %p89 = por %p87, %p88
      %p91 = scmp.ne.s32.totalorder %s76, %s90
      %p92 = scmp.eq.s32.totalorder %s24, 0
      %p93 = por %p91, %p92
      %s95 = sadd.s32 %s94, 1
      %p98 = scmp.eq.s32.totalorder %s18, 1
      %p99 = scmp.ne.s32.totalorder %s94, %s96
      %p100 = scmp.eq.s32.totalorder %s18, 0
      %p101 = por %p99, %p100
      %p102 = scmp.ne.s32.totalorder %s94, %s96
      %p103 = scmp.eq.s32.totalorder %s23, 1
      %p104 = por %p102, %p103
      %p105 = scmp.ne.s32.totalorder %s96, %s97
      %p106 = scmp.eq.s32.totalorder %s23, 0
      %p107 = por %p105, %p106
      %p108 = scmp.ne.s32.totalorder %s96, %s97
      %p109 = scmp.eq.s32.totalorder %s24, 1
      %p110 = por %p108, %p109
      %p112 = scmp.ne.s32.totalorder %s97, %s111
      %p113 = scmp.eq.s32.totalorder %s24, 0
      %p114 = por %p112, %p113
      %s116 = sadd.s32 %s115, 1
      %p119 = scmp.eq.s32.totalorder %s18, 1
      %p120 = scmp.ne.s32.totalorder %s115, %s117
      %p121 = scmp.eq.s32.totalorder %s18, 0
      %p122 = por %p120, %p121
      %p123 = scmp.ne.s32.totalorder %s115, %s117
      %p124 = scmp.eq.s32.totalorder %s23, 1
      %p125 = por %p123, %p124
      %p126 = scmp.ne.s32.totalorder %s117, %s118
      %p127 = scmp.eq.s32.totalorder %s23, 0
      %p128 = por %p126, %p127
      %p129 = scmp.ne.s32.totalorder %s117, %s118
      %p130 = scmp.eq.s32.totalorder %s24, 1
      %p131 = por %p129, %p130
      %p133 = scmp.ne.s32.totalorder %s118, %s132
      %p134 = scmp.eq.s32.totalorder %s24, 0
      %p135 = por %p133, %p134
      %s136 = ssub.s32 %s18, %s25
      %p137 = scmp.eq.s32.totalorder %s136, 0
      %s139 = sadd.s32 %s138, 1
      %s140 = scalar_select %p137, %s138, %s139
      %p143 = pneg %p137
      %p144 = scmp.eq.s32.totalorder %s18, 1
      %p145 = por %p143, %p144
      %p146 = scmp.ne.s32.totalorder %s138, %s141
      %p147 = scmp.eq.s32.totalorder %s18, 0
      %p148 = por %p146, %p147
      %p149 = scmp.ne.s32.totalorder %s138, %s141
      %p150 = scmp.eq.s32.totalorder %s23, 1
      %p151 = por %p149, %p150
      %p152 = scmp.ne.s32.totalorder %s141, %s142
      %p153 = scmp.eq.s32.totalorder %s23, 0
      %p154 = por %p152, %p153
      %p155 = scmp.ne.s32.totalorder %s141, %s142
      %p156 = scmp.eq.s32.totalorder %s24, 1
      %p157 = por %p155, %p156
      %p159 = scmp.ne.s32.totalorder %s142, %s158
      %p160 = scmp.eq.s32.totalorder %s24, 0
      %p161 = por %p159, %p160
      %p162 = scmp.le.s32.totalorder 1, %s18
      %p163 = scmp.lt.s32.totalorder %s18, 3
      %p164 = pnand %p162, %p163
      %p165 = pneg %p164
      // Predicated region
      $region9: #{tpu_custom_call.1} parent=5 // pred_check
        _
      $region10: #{tpu_custom_call.1} parent=5 // pred_check_branch
        %167 = sbr.rel (%p164) target = $region12
      $region11: #{tpu_custom_call.1} parent=5 // pred_region
        %s168 = ssub.s32 %s18, 1
        // Predicated region
        $region13: #{tpu_custom_call.1} parent=11 // pred_check
          %p169 = pneg %p65
        $region14: #{tpu_custom_call.1} parent=11 // pred_check_branch
          %171 = sbr.rel (%p169) target = $region16
        $region15: #{tpu_custom_call.1} parent=11 // pred_region
          %173 = vsyncadd [#allocation6], 0
          %s174 = sshll.u32 %s1, 4
          %s175 = int_to_ptr.hbm [resolvable:$true] %s174
          %s176 = sshll.u32 [#allocation5], 4
          %s177 = int_to_ptr.vmem [resolvable:$true] %s176
          %182 = dma.hbm_to_vmem [thread:$0]  %s175, 512, %s177, [#allocation6], 128, 128, 8
        $region16: #{tpu_custom_call.1} parent=11 // pred_fallthru
          _
        // Predicated region
        $region17: #{tpu_custom_call.1} parent=11 // pred_check
          %p183 = pneg %p86
        $region18: #{tpu_custom_call.1} parent=11 // pred_check_branch
          %185 = sbr.rel (%p183) target = $region20
        $region19: #{tpu_custom_call.1} parent=11 // pred_region
          _
        $region20: #{tpu_custom_call.1} parent=11 // pred_fallthru
          _
        // Predicated region
        $region21: #{tpu_custom_call.1} parent=11 // pred_check
          %p186 = pneg %p107
        $region22: #{tpu_custom_call.1} parent=11 // pred_check_branch
          %188 = sbr.rel (%p186) target = $region24
        $region23: #{tpu_custom_call.1} parent=11 // pred_region
          %190 = vsyncadd [#allocation6], 0
          %s191 = sshll.u32 %s3, 4
          %s192 = int_to_ptr.hbm [resolvable:$true] %s191
          %s193 = sshll.u32 [#allocation7], 4
          %s194 = int_to_ptr.vmem [resolvable:$true] %s193
          %199 = dma.hbm_to_vmem [thread:$0]  %s192, 1024, %s194, [#allocation6], 128, 128, 8
        $region24: #{tpu_custom_call.1} parent=11 // pred_fallthru
          _
        // Predicated region
        $region25: #{tpu_custom_call.1} parent=11 // pred_check
          %p200 = pneg %p128
        $region26: #{tpu_custom_call.1} parent=11 // pred_check_branch
          %202 = sbr.rel (%p200) target = $region28
        $region27: #{tpu_custom_call.1} parent=11 // pred_region
          _
        $region28: #{tpu_custom_call.1} parent=11 // pred_fallthru
          _
      $region12: #{tpu_custom_call.1} parent=5 // pred_fallthru
        _
      %p203 = scmp.lt.s32.totalorder %s18, 2
      // Predicated region
      $region29: #{tpu_custom_call.1} parent=5 // pred_check
        %p204 = pneg %p203
      $region30: #{tpu_custom_call.1} parent=5 // pred_check_branch
        %206 = sbr.rel (%p204) target = $region32
      $region31: #{tpu_custom_call.1} parent=5 // pred_region
        // Predicated region
        $region33: #{tpu_custom_call.1} parent=31 // pred_check
          %p207 = pneg %p38
        $region34: #{tpu_custom_call.1} parent=31 // pred_check_branch
          %209 = sbr.rel (%p207) target = $region36
        $region35: #{tpu_custom_call.1} parent=31 // pred_region
          %s210 = sand.u32 %s28, 1
          %s211 = scalar_lea.sflag [#allocation3], %s210
          %s212 = sand.u32 %s28, 1
          %s213 = smul.addr %s212, 8
          %s214 = scalar_lea.vmem [#allocation2], %s213
          %216 = vsyncadd %s211, 0
          %s217 = smul.addr %s18, 8
          %s218 = scalar_lea.hbm %s0, %s217
          %s220 = sshll.u32 %s218, 4
          %s221 = int_to_ptr.hbm [resolvable:$true] %s220
          %s222 = sshll.u32 %s214, 4
          %s223 = int_to_ptr.vmem [resolvable:$true] %s222
          %225 = dma.hbm_to_vmem [thread:$0]  %s221, 128, %s223, %s211
        $region36: #{tpu_custom_call.1} parent=31 // pred_fallthru
          _
      $region32: #{tpu_custom_call.1} parent=5 // pred_fallthru
        _
      %p226 = scmp.le.s32.totalorder 1, %s18
      %p227 = scmp.lt.s32.totalorder %s18, 3
      %p228 = pnand %p226, %p227
      %p229 = pneg %p228
      // Predicated region
      $region37: #{tpu_custom_call.1} parent=5 // pred_check
        _
      $region38: #{tpu_custom_call.1} parent=5 // pred_check_branch
        %231 = sbr.rel (%p228) target = $region40
      $region39: #{tpu_custom_call.1} parent=5 // pred_region
        %s232 = ssub.s32 %s18, 1
        %s233 = sand.u32 %s31, 1
        %s234 = scalar_lea.sflag [#allocation3], %s233
        %s235 = sand.u32 %s31, 1
        %s236 = smul.addr %s235, 8
        %s237 = scalar_lea.vmem [#allocation2], %s236
        // Predicated region
        $region41: #{tpu_custom_call.1} parent=39 // pred_check
          %p238 = pneg %p44
        $region42: #{tpu_custom_call.1} parent=39 // pred_check_branch
          %240 = sbr.rel (%p238) target = $region44
        $region43: #{tpu_custom_call.1} parent=39 // pred_region
          %242 = dma.done %s234, 128
        $region44: #{tpu_custom_call.1} parent=39 // pred_fallthru
          _
        // Predicated region
        $region45: #{tpu_custom_call.1} parent=39 // pred_check
          %p243 = pneg %p65
        $region46: #{tpu_custom_call.1} parent=39 // pred_check_branch
          %245 = sbr.rel (%p243) target = $region48
        $region47: #{tpu_custom_call.1} parent=39 // pred_region
          %247 = dma.done [#allocation6], 512
        $region48: #{tpu_custom_call.1} parent=39 // pred_fallthru
          _
        // Predicated region
        $region49: #{tpu_custom_call.1} parent=39 // pred_check
          %p248 = pneg %p107
        $region50: #{tpu_custom_call.1} parent=39 // pred_check_branch
          %250 = sbr.rel (%p248) target = $region52
        $region51: #{tpu_custom_call.1} parent=39 // pred_region
          %252 = dma.done [#allocation6], 1024
        $region52: #{tpu_custom_call.1} parent=39 // pred_fallthru
          _
        %s253 = sand.u32 %s31, 1
        %s254 = scalar_lea.sflag [#allocation3], %s253
        %s255 = sand.u32 %s31, 1
        %s256 = smul.addr %s255, 8
        %s257 = scalar_lea.vmem [#allocation2], %s256
        %p258 = pneg %p44
        %p259 = pneg %p41
        %p260 = pneg %p65
        %p261 = pneg %p62
        %p262 = pneg %p86
        %p263 = pneg %p83
        %p264 = pneg %p107
        %p265 = pneg %p104
        %p266 = pneg %p128
        %p267 = pneg %p125
        %p268 = pneg %p154
        %p269 = pneg %p151
        %s270 = sand.u32 %s141, 1
        %s271 = scalar_lea.sflag [#allocation4], %s270
        %s272 = sand.u32 %s141, 1
        %s273 = smul.addr %s272, 8
        %s274 = scalar_lea.vmem [#allocation8], %s273
        %v275 = vld [vmem:[%s237] sm:$0xff]
        %v276 = vld [vmem:[#allocation5] sm:$0xff]
        %v277 = vld [vmem:[#allocation5 + $0x8] sm:$0xff]
        %v278 = vld [vmem:[#allocation5 + $0x10] sm:$0xff]
        %v279 = vld [vmem:[#allocation5 + $0x18] sm:$0xff]
        %v280 = vld [vmem:[#allocation7] sm:$0xff]
        %v281 = vld [vmem:[#allocation7 + $0x8] sm:$0xff]
        %v282 = vld [vmem:[#allocation7 + $0x10] sm:$0xff]
        %v283 = vld [vmem:[#allocation7 + $0x18] sm:$0xff]
        %v284 = vld [vmem:[#allocation7 + $0x20] sm:$0xff]
        %v285 = vld [vmem:[#allocation7 + $0x28] sm:$0xff]
        %v286 = vld [vmem:[#allocation7 + $0x30] sm:$0xff]
        %v287 = vld [vmem:[#allocation7 + $0x38] sm:$0xff]
        %v288 = vld [vmem:[%s2] sm:$0x1]
        %v290 = vperm.slane %v288, 0
        %vm292 = vcmask 261120
        %v294 = vsel %vm292, %v275, 0
        %296 = vmatpush.msra.mxu0 0.0
        %297 = vmatpush.msra.mxu0 0.0
        %298 = vmatpush.msra.mxu0 0.0
        %299 = vmatpush.msra.mxu0 0.0
        %300 = vmatpush.msra.mxu0 0.0
        %301 = vmatpush.msra.mxu0 0.0
        %302 = vmatpush.msra.mxu0 0.0
        %303 = vmatpush.msra.mxu0 0.0
        %304 = vmatpush.msra.mxu0 0.0
        %305 = vmatpush.msra.mxu0 0.0
        %306 = vmatpush.msra.mxu0 0.0
        %307 = vmatpush.msra.mxu0 0.0
        %308 = vmatpush.msra.mxu0 %v279
        %309 = vmatpush.msra.mxu0 %v278
        %310 = vmatpush.msra.mxu0 %v277
        %311 = vmatpush.msra.mxu0 %v276
        %312 = vmatmul.f32.gmra.mxu0 %v294
        %v313 = vpop.f32.mrf.mxu0
        %v314 = vadd.f32 %v290, %v313
        %315 = vdwg.mxu0
        %v316 = vmax.f32 %v314, 0.0
        %v317 = vld [vmem:[%s4] sm:$0x1]
        %v319 = vperm.slane %v317, 0
        %vm321 = vcmask 523264
        %v323 = vsel %vm321, %v316, 0
        %325 = vmatpush.msra.mxu0 0.0
        %326 = vmatpush.msra.mxu0 0.0
        %327 = vmatpush.msra.mxu0 0.0
        %328 = vmatpush.msra.mxu0 0.0
        %329 = vmatpush.msra.mxu0 0.0
        %330 = vmatpush.msra.mxu0 0.0
        %331 = vmatpush.msra.mxu0 0.0
        %332 = vmatpush.msra.mxu0 0.0
        %333 = vmatpush.msra.mxu0 %v287
        %334 = vmatpush.msra.mxu0 %v286
        %335 = vmatpush.msra.mxu0 %v285
        %336 = vmatpush.msra.mxu0 %v284
        %337 = vmatpush.msra.mxu0 %v283
        %338 = vmatpush.msra.mxu0 %v282
        %339 = vmatpush.msra.mxu0 %v281
        %340 = vmatpush.msra.mxu0 %v280
        %341 = vmatmul.f32.gmra.mxu0 %v323
        %v342 = vpop.f32.mrf.mxu0
        %v343 = vadd.f32 %v319, %v342
        %344 = vdwg.mxu0
        %345 = vst [vmem:[%s274] sm:$0xff] %v343
        %s346 = sand.u32 %s141, 1
        %s347 = scalar_lea.sflag [#allocation4], %s346
        %s348 = sand.u32 %s141, 1
        %s349 = smul.addr %s348, 8
        %s350 = scalar_lea.vmem [#allocation8], %s349
        // Predicated region
        $region53: #{tpu_custom_call.1} parent=39 // pred_check
          %p351 = pneg %p151
        $region54: #{tpu_custom_call.1} parent=39 // pred_check_branch
          %353 = sbr.rel (%p351) target = $region56
        $region55: #{tpu_custom_call.1} parent=39 // pred_region
          %355 = vsyncadd %s347, 0
          %s356 = smul.addr %s23, 8
          %s357 = scalar_lea.hbm %s5, %s356
          %s359 = sshll.u32 %s350, 4
          %s360 = int_to_ptr.vmem [resolvable:$true] %s359
          %s361 = sshll.u32 %s357, 4
          %s362 = int_to_ptr.hbm [resolvable:$true] %s361
          %364 = dma.vmem_to_hbm [thread:$0]  %s360, 128, %s362, %s347
        $region56: #{tpu_custom_call.1} parent=39 // pred_fallthru
          _
      $region40: #{tpu_custom_call.1} parent=5 // pred_fallthru
        _
      %p365 = scmp.le.s32.totalorder 2, %s18
      // Predicated region
      $region57: #{tpu_custom_call.1} parent=5 // pred_check
        %p366 = pneg %p365
      $region58: #{tpu_custom_call.1} parent=5 // pred_check_branch
        %368 = sbr.rel (%p366) target = $region60
      $region59: #{tpu_custom_call.1} parent=5 // pred_region
        %s369 = ssub.s32 %s18, 2
        // Predicated region
        $region61: #{tpu_custom_call.1} parent=59 // pred_check
          %p370 = pneg %p157
        $region62: #{tpu_custom_call.1} parent=59 // pred_check_branch
          %372 = sbr.rel (%p370) target = $region64
        $region63: #{tpu_custom_call.1} parent=59 // pred_region
          %s373 = sand.u32 %s142, 1
          %s374 = scalar_lea.sflag [#allocation4], %s373
          %s375 = sand.u32 %s142, 1
          %s376 = smul.addr %s375, 8
          %s377 = scalar_lea.vmem [#allocation8], %s376
          %379 = dma.done %s374, 128
        $region64: #{tpu_custom_call.1} parent=59 // pred_fallthru
          _
      $region60: #{tpu_custom_call.1} parent=5 // pred_fallthru
        _
    $region6: #{tpu_custom_call.1} parent=1 // loop_footer
      %s22 = sadd.s32 1, %s18
    $region7: #{tpu_custom_call.1} parent=1 // loop_footer_branch
      %17 = sbr.rel target = $region3
    $region8: #{tpu_custom_call.1} parent=1 // loop_exit
      _
    %380 = vsyncpa [#allocation3], 1
    %s381 = scalar_lea.sflag [#allocation3], 1
    %382 = vsyncpa %s381, 1
    %383 = vsyncpa [#allocation6], 1
    %384 = vsyncpa [#allocation4], 1
    %s385 = scalar_lea.sflag [#allocation4], 1
    %386 = vsyncpa %s385, 1

</llo_original>
